<compile_context>
chip_gen: v5e
topology: v5e:2x2
jax: 0.10.0
libtpu: 0.0.40
codegen_flags: <defaults>
</compile_context>

<pallas_src>
import math

import jax
import jax.numpy as jnp
from jax.experimental import pallas as pl
from jax.experimental.pallas import tpu as pltpu

_LANE = 128
_SUBLANE = 8


def _round_up(n, m):
    return ((n + m - 1) // m) * m


def _pad_axis(a, axis, size):
    if a.shape[axis] == size:
        return a
    pads = [(0, 0)] * a.ndim
    pads[axis] = (0, size - a.shape[axis])
    return jnp.pad(a, pads)


def _make_kernel(exact_sigmoid):
    def sigmoid(h):
        if exact_sigmoid:
            return jax.nn.sigmoid(h)
        # exp on the EUP + approx reciprocal (also EUP) + VPU add.
        # Numerically safe: exp(-h) -> inf => recip -> 0; exp(-h) -> 0 => 1.
        return pl.reciprocal(1.0 + jnp.exp(-h), approx=True)

    def mlp_kernel(x_ref, w1_ref, b1_ref, w2_ref, b2_ref, w3_ref, b3_ref, o_ref):
        mm_dtype = w1_ref.dtype
        # In-kernel cast of x (no wrapper-side HBM roundtrip).
        x = x_ref[...].astype(mm_dtype)

        # fc1 + sigmoid (f32 accumulation on the MXU, f32 activation math)
        h1 = jnp.dot(x, w1_ref[...], preferred_element_type=jnp.float32)
        h1 = sigmoid(h1 + b1_ref[...])

        # fc2 + sigmoid
        h2 = jnp.dot(h1.astype(mm_dtype), w2_ref[...],
                     preferred_element_type=jnp.float32)
        h2 = sigmoid(h2 + b2_ref[...])

        # fc3 (no activation); store directly in the output dtype.
        out = jnp.dot(h2.astype(mm_dtype), w3_ref[...],
                      preferred_element_type=jnp.float32)
        o_ref[...] = (out + b3_ref[...]).astype(o_ref.dtype)

    return mlp_kernel


def _tpu_caps():
    """Returns (physical VMEM bytes per core, whether the chip has >1 TensorCore)."""
    vmem_bytes = 128 * 1024 * 1024
    multi_tc = False
    try:
        vmem_bytes = int(pltpu.get_tpu_info().vmem_capacity_bytes)
    except Exception:
        pass
    try:
        kind = jax.devices()[0].device_kind.lower()
        multi_tc = any(tag in kind for tag in ("v7", "v5p", "v4"))
    except Exception:
        pass
    if vmem_bytes <= 64 * 1024 * 1024:   # v7x: 64 MiB/TC, 2 TCs per chip.
        multi_tc = True
    return vmem_bytes, multi_tc


def prepare_params(w1, b1, w2, b2, w3, b3, compute_dtype=jnp.bfloat16):
    """Pad feature dims to lane multiples and cast weights ONCE (outside hot path).

    Weights are stored pre-transposed as (in_features, out_features); biases (1, out).
    Zero padding is exact: padded hidden columns give sigmoid(0)=0.5 but multiply
    zero rows of the next weight, so nothing leaks into the sliced output.
    """
    input_dim, hidden_dim = w1.shape
    output_dim = w3.shape[1]
    in_p = _round_up(input_dim, _LANE)
    hid_p = _round_up(hidden_dim, _LANE)
    out_p = _round_up(output_dim, _LANE)

    w1p = _pad_axis(_pad_axis(w1, 1, hid_p), 0, in_p).astype(compute_dtype)
    w2p = _pad_axis(_pad_axis(w2, 1, hid_p), 0, hid_p).astype(compute_dtype)
    w3p = _pad_axis(_pad_axis(w3, 1, out_p), 0, hid_p).astype(compute_dtype)
    b1p = _pad_axis(b1.reshape(1, -1), 1, hid_p).astype(jnp.float32)
    b2p = _pad_axis(b2.reshape(1, -1), 1, hid_p).astype(jnp.float32)
    b3p = _pad_axis(b3.reshape(1, -1), 1, out_p).astype(jnp.float32)
    return {"params": (w1p, b1p, w2p, b2p, w3p, b3p),
            "dims": (input_dim, hidden_dim, output_dim)}


def fully_connected_nn(x, prepared, *, batch_tile=None):
    """x: (B, input_dim) in its native dtype.  prepared: output of prepare_params."""
    w1p, b1p, w2p, b2p, w3p, b3p = prepared["params"]
    input_dim, hidden_dim, output_dim = prepared["dims"]
    in_p, hid_p = w1p.shape
    out_p = w3p.shape[1]
    compute_dtype = w1p.dtype

    B, xdim = x.shape
    assert xdim == input_dim
    out_dtype = x.dtype

    vmem_bytes, multi_tc = _tpu_caps()
    # Generation-aware cap: ~100 MiB on 128-MiB chips (v5e/v6e), ~56 MiB on v7x.
    vmem_cap = int(min(vmem_bytes - 8 * 1024 * 1024, 100 * 1024 * 1024))

    cbytes = jnp.dtype(compute_dtype).itemsize
    xbytes = jnp.dtype(x.dtype).itemsize
    obytes = jnp.dtype(out_dtype).itemsize

    # Resident weights + biases (single-buffered with pl.Buffered(1)).
    weight_bytes = ((in_p * hid_p + hid_p * hid_p + hid_p * out_p) * cbytes
                    + (2 * hid_p + out_p) * 4)
    # Per-row cost: double-buffered x/out tiles + f32 intermediates + bf16 copies.
    per_row = (2 * in_p * xbytes + 2 * out_p * obytes
               + (2 * hid_p + out_p) * 4 + (in_p + hid_p) * cbytes)

    if batch_tile is None:
        budget_rows = max(_SUBLANE, (vmem_cap - 2 * weight_bytes) // max(per_row, 1))
        cap_rows = int(min(512, budget_rows))
        if multi_tc:
            # >= 2 tiles, even tile count -> balanced work across both TensorCores.
            n_tiles = max(2, pl.cdiv(B, cap_rows))
            n_tiles += n_tiles % 2
            batch_tile = pl.cdiv(B, n_tiles)
        else:
            # Single TensorCore: one big tile; extra grid steps are pure overhead.
            batch_tile = cap_rows

    batch_tile = max(int(batch_tile), 1)
    if batch_tile >= B:
        batch_tile = B                              # full-dim block (always legal)
    else:
        batch_tile = _round_up(batch_tile, _SUBLANE)
        if batch_tile >= B:
            batch_tile = B
    grid = (pl.cdiv(B, batch_tile),)

    # VMEM limit: estimate with (worst-case) double-buffered weights so the
    # fallback path also fits; clamp to the generation-aware cap.
    est = 2 * weight_bytes + batch_tile * per_row + (4 << 20)
    vmem_limit = int(min(vmem_cap, max(32 << 20, est)))

    # Only the lane (K) dim of x needs zero padding; no batch padding.
    xp = _pad_axis(x, 1, in_p) if in_p != input_dim else x

    exact_sigmoid = jnp.dtype(compute_dtype) == jnp.dtype(jnp.float32)
    kernel = _make_kernel(exact_sigmoid)

    row_map = lambda i: (i, 0)    # x / out: tile over batch
    const_map = lambda i: (0, 0)  # weights / biases: resident block

    def weight_specs(single_buffered):
        kw = {"pipeline_mode": pl.Buffered(1)} if single_buffered else {}
        return [
            pl.BlockSpec((in_p, hid_p), const_map, **kw),
            pl.BlockSpec((1, hid_p), const_map, **kw),
            pl.BlockSpec((hid_p, hid_p), const_map, **kw),
            pl.BlockSpec((1, hid_p), const_map, **kw),
            pl.BlockSpec((hid_p, out_p), const_map, **kw),
            pl.BlockSpec((1, out_p), const_map, **kw),
        ]

    def run(single_buffered):
        return pl.pallas_call(
            kernel,
            out_shape=jax.ShapeDtypeStruct((B, out_p), out_dtype),
            grid_spec=pltpu.PrefetchScalarGridSpec(
                num_scalar_prefetch=0,
                grid=grid,
                in_specs=([pl.BlockSpec((batch_tile, in_p), row_map)]
                          + weight_specs(single_buffered)),
                out_specs=pl.BlockSpec((batch_tile, out_p), row_map),
            ),
            compiler_params=pltpu.CompilerParams(
                dimension_semantics=("parallel",),
                vmem_limit_bytes=vmem_limit),
        )(xp, w1p, b1p, w2p, b2p, w3p, b3p)

    try:
        out = run(single_buffered=hasattr(pl, "Buffered"))
    except Exception:
        # Fallback: default double-buffering if Buffered(1) is not supported here.
        out = run(single_buffered=False)

    if out_p != output_dim:
        out = out[:, :output_dim]
    return out


def init_params(key, input_dim, hidden_dim, output_dim):
    """Deterministic init mimicking nn.Linear's U(-1/sqrt(fan_in), 1/sqrt(fan_in))."""
    ks = jax.random.split(key, 6)

    def linear(kw, kb, fan_in, fan_out):
        bound = 1.0 / math.sqrt(fan_in)
        # Stored already transposed: (fan_in, fan_out)
        w = jax.random.uniform(kw, (fan_in, fan_out), jnp.float32, -bound, bound)
        b = jax.random.uniform(kb, (1, fan_out), jnp.float32, -bound, bound)
        return w, b

    w1, b1 = linear(ks[0], ks[1], input_dim, hidden_dim)
    w2, b2 = linear(ks[2], ks[3], hidden_dim, hidden_dim)
    w3, b3 = linear(ks[4], ks[5], hidden_dim, output_dim)
    return w1, b1, w2, b2, w3, b3


if __name__ == "__main__":
    input_dim, hidden_dim, output_dim = 16, 32, 8
    batch = 16

    key = jax.random.PRNGKey(0)
    kx, kp = jax.random.split(key)
    x = jax.random.normal(kx, (batch, input_dim), jnp.float32)
    w1, b1, w2, b2, w3, b3 = init_params(kp, input_dim, hidden_dim, output_dim)

    # Reference in plain JAX (same semantics as the PyTorch forward).
    ref = jax.nn.sigmoid(x @ w1 + b1)
    ref = jax.nn.sigmoid(ref @ w2 + b2)
    ref = ref @ w3 + b3

    # Pure-f32 path: tight check of the padding / tiling structure.
    prep_f32 = prepare_params(w1, b1, w2, b2, w3, b3, compute_dtype=jnp.float32)
    out_f32 = jax.block_until_ready(fully_connected_nn(x, prep_f32))
    assert out_f32.shape == (batch, output_dim)
    assert jnp.allclose(out_f32, ref, atol=1e-5, rtol=1e-5)

    # Default bf16-matmul / f32-accumulate path (preferred on the MXU).
    prep_bf16 = prepare_params(w1, b1, w2, b2, w3, b3, compute_dtype=jnp.bfloat16)
    out_bf16 = jax.block_until_ready(fully_connected_nn(x, prep_bf16))
    assert out_bf16.shape == (batch, output_dim)
    assert jnp.allclose(out_bf16, ref, atol=5e-2, rtol=5e-2)

    print("KERNEL_OK")
</pallas_src>

<mosaic_0001>
module attributes {stable_mosaic.version = 11 : i64} {
  func.func @mlp_kernel(%arg0: i32, %arg1: memref<16x128xf32, #tpu.memory_space<vmem>>, %arg2: memref<128x128xf32, #tpu.memory_space<vmem>>, %arg3: memref<1x128xf32, #tpu.memory_space<vmem>>, %arg4: memref<128x128xf32, #tpu.memory_space<vmem>>, %arg5: memref<1x128xf32, #tpu.memory_space<vmem>>, %arg6: memref<128x128xf32, #tpu.memory_space<vmem>>, %arg7: memref<1x128xf32, #tpu.memory_space<vmem>>, %arg8: memref<16x128xf32, #tpu.memory_space<vmem>>) attributes {dimension_semantics = [#tpu.dimension_semantics<parallel>], iteration_bounds = array<i64: 1>, scalar_prefetch = 0 : i64, scratch_operands = 0 : i64, tpu.core_type = #tpu.core_type<tc>, window_params = [{transform_indices = @transform_0, window_bounds = array<i64: 16, 128>}, {pipeline_mode = #tpu.pipeline_mode<synchronous>, transform_indices = @transform_1, window_bounds = array<i64: 128, 128>}, {pipeline_mode = #tpu.pipeline_mode<synchronous>, transform_indices = @transform_2, window_bounds = array<i64: 1, 128>}, {pipeline_mode = #tpu.pipeline_mode<synchronous>, transform_indices = @transform_3, window_bounds = array<i64: 128, 128>}, {pipeline_mode = #tpu.pipeline_mode<synchronous>, transform_indices = @transform_4, window_bounds = array<i64: 1, 128>}, {pipeline_mode = #tpu.pipeline_mode<synchronous>, transform_indices = @transform_5, window_bounds = array<i64: 128, 128>}, {pipeline_mode = #tpu.pipeline_mode<synchronous>, transform_indices = @transform_6, window_bounds = array<i64: 1, 128>}, {transform_indices = @transform_7, window_bounds = array<i64: 16, 128>}]} {
    %c0 = arith.constant 0 : index
    %c0_0 = arith.constant 0 : index
    %0 = vector.load %arg1[%c0, %c0_0] : memref<16x128xf32, #tpu.memory_space<vmem>>, vector<16x128xf32>
    %c0_1 = arith.constant 0 : index
    %c0_2 = arith.constant 0 : index
    %1 = vector.load %arg2[%c0_1, %c0_2] : memref<128x128xf32, #tpu.memory_space<vmem>>, vector<128x128xf32>
    %cst = arith.constant dense<0.000000e+00> : vector<16x128xf32>
    %2 = tpu.matmul %0, %1, %cst {dimension_numbers = #tpu.dot_dimension_numbers<[1], [0], [0], [1], [0, 0, 1, 1], [], []>} : vector<16x128xf32>, vector<128x128xf32>, vector<16x128xf32> -> vector<16x128xf32>
    %c0_3 = arith.constant 0 : index
    %c0_4 = arith.constant 0 : index
    %3 = vector.load %arg3[%c0_3, %c0_4] : memref<1x128xf32, #tpu.memory_space<vmem>>, vector<1x128xf32>
    %4 = vector.broadcast %3 : vector<1x128xf32> to vector<16x128xf32>
    %5 = arith.addf %2, %4 : vector<16x128xf32>
    %6 = arith.negf %5 : vector<16x128xf32>
    %7 = math.exp %6 : vector<16x128xf32>
    %cst_5 = arith.constant 1.000000e+00 : f32
    %8 = vector.broadcast %cst_5 : f32 to vector<16x128xf32>
    %9 = arith.addf %8, %7 : vector<16x128xf32>
    %10 = arith.divf %8, %9 : vector<16x128xf32>
    %c0_6 = arith.constant 0 : index
    %c0_7 = arith.constant 0 : index
    %11 = vector.load %arg4[%c0_6, %c0_7] : memref<128x128xf32, #tpu.memory_space<vmem>>, vector<128x128xf32>
    %cst_8 = arith.constant dense<0.000000e+00> : vector<16x128xf32>
    %12 = tpu.matmul %10, %11, %cst_8 {dimension_numbers = #tpu.dot_dimension_numbers<[1], [0], [0], [1], [0, 0, 1, 1], [], []>} : vector<16x128xf32>, vector<128x128xf32>, vector<16x128xf32> -> vector<16x128xf32>
    %c0_9 = arith.constant 0 : index
    %c0_10 = arith.constant 0 : index
    %13 = vector.load %arg5[%c0_9, %c0_10] : memref<1x128xf32, #tpu.memory_space<vmem>>, vector<1x128xf32>
    %14 = vector.broadcast %13 : vector<1x128xf32> to vector<16x128xf32>
    %15 = arith.addf %12, %14 : vector<16x128xf32>
    %16 = arith.negf %15 : vector<16x128xf32>
    %17 = math.exp %16 : vector<16x128xf32>
    %cst_11 = arith.constant 1.000000e+00 : f32
    %18 = vector.broadcast %cst_11 : f32 to vector<16x128xf32>
    %19 = arith.addf %18, %17 : vector<16x128xf32>
    %20 = arith.divf %18, %19 : vector<16x128xf32>
    %c0_12 = arith.constant 0 : index
    %c0_13 = arith.constant 0 : index
    %21 = vector.load %arg6[%c0_12, %c0_13] : memref<128x128xf32, #tpu.memory_space<vmem>>, vector<128x128xf32>
    %cst_14 = arith.constant dense<0.000000e+00> : vector<16x128xf32>
    %22 = tpu.matmul %20, %21, %cst_14 {dimension_numbers = #tpu.dot_dimension_numbers<[1], [0], [0], [1], [0, 0, 1, 1], [], []>} : vector<16x128xf32>, vector<128x128xf32>, vector<16x128xf32> -> vector<16x128xf32>
    %c0_15 = arith.constant 0 : index
    %c0_16 = arith.constant 0 : index
    %23 = vector.load %arg7[%c0_15, %c0_16] : memref<1x128xf32, #tpu.memory_space<vmem>>, vector<1x128xf32>
    %24 = vector.broadcast %23 : vector<1x128xf32> to vector<16x128xf32>
    %25 = arith.addf %22, %24 : vector<16x128xf32>
    %c0_17 = arith.constant 0 : index
    %c0_18 = arith.constant 0 : index
    %26 = vector.load %arg8[%c0_17, %c0_18] : memref<16x128xf32, #tpu.memory_space<vmem>>, vector<16x128xf32>
    tpu.vector_store %arg8[%c0_17, %c0_18], %25 {strides = array<i32>} : memref<16x128xf32, #tpu.memory_space<vmem>>, vector<16x128xf32>,
    return
  }
  func.func @transform_0(%arg0: i32) -> (i32, i32) {
    %c0_i32 = arith.constant 0 : i32
    %c0_i32_0 = arith.constant 0 : i32
    return %arg0, %c0_i32 : i32, i32
  }
  func.func @transform_1(%arg0: i32) -> (i32, i32) {
    %c0_i32 = arith.constant 0 : i32
    %c0_i32_0 = arith.constant 0 : i32
    %c0_i32_1 = arith.constant 0 : i32
    return %c0_i32, %c0_i32_0 : i32, i32
  }
  func.func @transform_2(%arg0: i32) -> (i32, i32) {
    %c0_i32 = arith.constant 0 : i32
    %c0_i32_0 = arith.constant 0 : i32
    %c0_i32_1 = arith.constant 0 : i32
    return %c0_i32, %c0_i32_0 : i32, i32
  }
  func.func @transform_3(%arg0: i32) -> (i32, i32) {
    %c0_i32 = arith.constant 0 : i32
    %c0_i32_0 = arith.constant 0 : i32
    %c0_i32_1 = arith.constant 0 : i32
    return %c0_i32, %c0_i32_0 : i32, i32
  }
  func.func @transform_4(%arg0: i32) -> (i32, i32) {
    %c0_i32 = arith.constant 0 : i32
    %c0_i32_0 = arith.constant 0 : i32
    %c0_i32_1 = arith.constant 0 : i32
    return %c0_i32, %c0_i32_0 : i32, i32
  }
  func.func @transform_5(%arg0: i32) -> (i32, i32) {
    %c0_i32 = arith.constant 0 : i32
    %c0_i32_0 = arith.constant 0 : i32
    %c0_i32_1 = arith.constant 0 : i32
    return %c0_i32, %c0_i32_0 : i32, i32
  }
  func.func @transform_6(%arg0: i32) -> (i32, i32) {
    %c0_i32 = arith.constant 0 : i32
    %c0_i32_0 = arith.constant 0 : i32
    %c0_i32_1 = arith.constant 0 : i32
    return %c0_i32, %c0_i32_0 : i32, i32
  }
  func.func @transform_7(%arg0: i32) -> (i32, i32) {
    %c0_i32 = arith.constant 0 : i32
    %c0_i32_0 = arith.constant 0 : i32
    return %arg0, %c0_i32 : i32, i32
  }
}

module attributes {stable_mosaic.version = 11 : i64} {
  func.func @mlp_kernel(%arg0: i32, %arg1: memref<16x128xf32, #tpu.memory_space<vmem>>, %arg2: memref<128x128xf32, #tpu.memory_space<vmem>>, %arg3: memref<1x128xf32, #tpu.memory_space<vmem>>, %arg4: memref<128x128xf32, #tpu.memory_space<vmem>>, %arg5: memref<1x128xf32, #tpu.memory_space<vmem>>, %arg6: memref<128x128xf32, #tpu.memory_space<vmem>>, %arg7: memref<1x128xf32, #tpu.memory_space<vmem>>, %arg8: memref<16x128xf32, #tpu.memory_space<vmem>>) attributes {dimension_semantics = [#tpu.dimension_semantics<parallel>], iteration_bounds = array<i64: 1>, scalar_prefetch = 0 : i64, scratch_operands = 0 : i64, tpu.core_type = #tpu.core_type<tc>, window_params = [{transform_indices = @transform_0, window_bounds = array<i64: 16, 128>}, {pipeline_mode = #tpu.pipeline_mode<synchronous>, transform_indices = @transform_1, window_bounds = array<i64: 128, 128>}, {pipeline_mode = #tpu.pipeline_mode<synchronous>, transform_indices = @transform_2, window_bounds = array<i64: 1, 128>}, {pipeline_mode = #tpu.pipeline_mode<synchronous>, transform_indices = @transform_3, window_bounds = array<i64: 128, 128>}, {pipeline_mode = #tpu.pipeline_mode<synchronous>, transform_indices = @transform_4, window_bounds = array<i64: 1, 128>}, {pipeline_mode = #tpu.pipeline_mode<synchronous>, transform_indices = @transform_5, window_bounds = array<i64: 128, 128>}, {pipeline_mode = #tpu.pipeline_mode<synchronous>, transform_indices = @transform_6, window_bounds = array<i64: 1, 128>}, {transform_indices = @transform_7, window_bounds = array<i64: 16, 128>}]} {
    %c0 = arith.constant 0 : index
    %c0_0 = arith.constant 0 : index
    %0 = vector.load %arg1[%c0, %c0_0] : memref<16x128xf32, #tpu.memory_space<vmem>>, vector<16x128xf32>
    %c0_1 = arith.constant 0 : index
    %c0_2 = arith.constant 0 : index
    %1 = vector.load %arg2[%c0_1, %c0_2] : memref<128x128xf32, #tpu.memory_space<vmem>>, vector<128x128xf32>
    %cst = arith.constant dense<0.000000e+00> : vector<16x128xf32>
    %2 = tpu.matmul %0, %1, %cst {dimension_numbers = #tpu.dot_dimension_numbers<[1], [0], [0], [1], [0, 0, 1, 1], [], []>} : vector<16x128xf32>, vector<128x128xf32>, vector<16x128xf32> -> vector<16x128xf32>
    %c0_3 = arith.constant 0 : index
    %c0_4 = arith.constant 0 : index
    %3 = vector.load %arg3[%c0_3, %c0_4] : memref<1x128xf32, #tpu.memory_space<vmem>>, vector<1x128xf32>
    %4 = vector.broadcast %3 : vector<1x128xf32> to vector<16x128xf32>
    %5 = arith.addf %2, %4 : vector<16x128xf32>
    %6 = arith.negf %5 : vector<16x128xf32>
    %7 = math.exp %6 : vector<16x128xf32>
    %cst_5 = arith.constant 1.000000e+00 : f32
    %8 = vector.broadcast %cst_5 : f32 to vector<16x128xf32>
    %9 = arith.addf %8, %7 : vector<16x128xf32>
    %10 = arith.divf %8, %9 : vector<16x128xf32>
    %c0_6 = arith.constant 0 : index
    %c0_7 = arith.constant 0 : index
    %11 = vector.load %arg4[%c0_6, %c0_7] : memref<128x128xf32, #tpu.memory_space<vmem>>, vector<128x128xf32>
    %cst_8 = arith.constant dense<0.000000e+00> : vector<16x128xf32>
    %12 = tpu.matmul %10, %11, %cst_8 {dimension_numbers = #tpu.dot_dimension_numbers<[1], [0], [0], [1], [0, 0, 1, 1], [], []>} : vector<16x128xf32>, vector<128x128xf32>, vector<16x128xf32> -> vector<16x128xf32>
    %c0_9 = arith.constant 0 : index
    %c0_10 = arith.constant 0 : index
    %13 = vector.load %arg5[%c0_9, %c0_10] : memref<1x128xf32, #tpu.memory_space<vmem>>, vector<1x128xf32>
    %14 = vector.broadcast %13 : vector<1x128xf32> to vector<16x128xf32>
    %15 = arith.addf %12, %14 : vector<16x128xf32>
    %16 = arith.negf %15 : vector<16x128xf32>
    %17 = math.exp %16 : vector<16x128xf32>
    %cst_11 = arith.constant 1.000000e+00 : f32
    %18 = vector.broadcast %cst_11 : f32 to vector<16x128xf32>
    %19 = arith.addf %18, %17 : vector<16x128xf32>
    %20 = arith.divf %18, %19 : vector<16x128xf32>
    %c0_12 = arith.constant 0 : index
    %c0_13 = arith.constant 0 : index
    %21 = vector.load %arg6[%c0_12, %c0_13] : memref<128x128xf32, #tpu.memory_space<vmem>>, vector<128x128xf32>
    %cst_14 = arith.constant dense<0.000000e+00> : vector<16x128xf32>
    %22 = tpu.matmul %20, %21, %cst_14 {dimension_numbers = #tpu.dot_dimension_numbers<[1], [0], [0], [1], [0, 0, 1, 1], [], []>} : vector<16x128xf32>, vector<128x128xf32>, vector<16x128xf32> -> vector<16x128xf32>
    %c0_15 = arith.constant 0 : index
    %c0_16 = arith.constant 0 : index
    %23 = vector.load %arg7[%c0_15, %c0_16] : memref<1x128xf32, #tpu.memory_space<vmem>>, vector<1x128xf32>
    %24 = vector.broadcast %23 : vector<1x128xf32> to vector<16x128xf32>
    %25 = arith.addf %22, %24 : vector<16x128xf32>
    %c0_17 = arith.constant 0 : index
    %c0_18 = arith.constant 0 : index
    %26 = vector.load %arg8[%c0_17, %c0_18] : memref<16x128xf32, #tpu.memory_space<vmem>>, vector<16x128xf32>
    tpu.vector_store %arg8[%c0_17, %c0_18], %25 {strides = array<i32>} : memref<16x128xf32, #tpu.memory_space<vmem>>, vector<16x128xf32>,
    return
  }
  func.func @transform_0(%arg0: i32) -> (i32, i32) {
    %c0_i32 = arith.constant 0 : i32
    %c0_i32_0 = arith.constant 0 : i32
    return %arg0, %c0_i32 : i32, i32
  }
  func.func @transform_1(%arg0: i32) -> (i32, i32) {
    %c0_i32 = arith.constant 0 : i32
    %c0_i32_0 = arith.constant 0 : i32
    %c0_i32_1 = arith.constant 0 : i32
    return %c0_i32, %c0_i32_0 : i32, i32
  }
  func.func @transform_2(%arg0: i32) -> (i32, i32) {
    %c0_i32 = arith.constant 0 : i32
    %c0_i32_0 = arith.constant 0 : i32
    %c0_i32_1 = arith.constant 0 : i32
    return %c0_i32, %c0_i32_0 : i32, i32
  }
  func.func @transform_3(%arg0: i32) -> (i32, i32) {
    %c0_i32 = arith.constant 0 : i32
    %c0_i32_0 = arith.constant 0 : i32
    %c0_i32_1 = arith.constant 0 : i32
    return %c0_i32, %c0_i32_0 : i32, i32
  }
  func.func @transform_4(%arg0: i32) -> (i32, i32) {
    %c0_i32 = arith.constant 0 : i32
    %c0_i32_0 = arith.constant 0 : i32
    %c0_i32_1 = arith.constant 0 : i32
    return %c0_i32, %c0_i32_0 : i32, i32
  }
  func.func @transform_5(%arg0: i32) -> (i32, i32) {
    %c0_i32 = arith.constant 0 : i32
    %c0_i32_0 = arith.constant 0 : i32
    %c0_i32_1 = arith.constant 0 : i32
    return %c0_i32, %c0_i32_0 : i32, i32
  }
  func.func @transform_6(%arg0: i32) -> (i32, i32) {
    %c0_i32 = arith.constant 0 : i32
    %c0_i32_0 = arith.constant 0 : i32
    %c0_i32_1 = arith.constant 0 : i32
    return %c0_i32, %c0_i32_0 : i32, i32
  }
  func.func @transform_7(%arg0: i32) -> (i32, i32) {
    %c0_i32 = arith.constant 0 : i32
    %c0_i32_0 = arith.constant 0 : i32
    return %arg0, %c0_i32 : i32, i32
  }
}

</mosaic_0001>

<llo_original>
// kernel: tpu_custom_call.1
$region0: #{tpu_custom_call.1}
  #allocation0 [shape = 'u32[]', space=smem, size = 0x4, offset = 0x4, fixed_abs, tag = 'smem constant byte address 0x4 - core index']
  #allocation1 [shape = 'u32[72,128]{1,0:T(1,128)}', space=vmem, size = 0x9000, scoped, tag = 'internal scratch']
  %s0 = inlined_call_operand.hbm [shape: f32[16,128], index: 0, kind: input, shape index: {}]
  %s1 = inlined_call_operand.hbm [shape: f32[128,128], index: 1, kind: input, shape index: {}]
  %s2 = inlined_call_operand.vmem [shape: f32[1,128], index: 2, kind: input, shape index: {}]
  %s3 = inlined_call_operand.hbm [shape: f32[128,128], index: 3, kind: input, shape index: {}]
  %s4 = inlined_call_operand.vmem [shape: f32[1,128], index: 4, kind: input, shape index: {}]
  %s5 = inlined_call_operand.hbm [shape: f32[128,128], index: 5, kind: input, shape index: {}]
  %s6 = inlined_call_operand.vmem [shape: f32[1,128], index: 6, kind: input, shape index: {}]
  %s7 = inlined_call_operand.hbm [shape: f32[16,128], index: 7, kind: output, shape index: {}]
  %s8 = sld [smem:[#allocation0]]
  $region54: #{tpu_custom_call.1} parent=0
    _
  %s10 = ssub.s32 1, %s8
  %s11 = scalar_select 0, %s10, %s8
  $region1: #{tpu_custom_call.1} parent=0
    #allocation2 [shape = 'u8[8192]{0}', space=vmem, size = 0x2000, scoped, tag = 'input window, operand 0, single buffered']
    #allocation3 [shape = 's32[1]{0}', space=sflag, size = 0x4, scoped, tag = 'scoped memory for tpu_custom_call.1']
    #allocation4 [shape = 's32[1]{0}', space=sflag, size = 0x4, scoped, tag = 'scoped memory for tpu_custom_call.1']
    #allocation5 [shape = 'u8[65536]{0}', space=vmem, size = 0x10000, scoped, tag = 'input window, operand 1, single buffered']
    #allocation6 [shape = 's32[1]{0}', space=sflag, size = 0x4, scoped, tag = 'scoped memory for tpu_custom_call.1']
    #allocation7 [shape = 'u8[65536]{0}', space=vmem, size = 0x10000, scoped, tag = 'input window, operand 3, single buffered']
    #allocation8 [shape = 'u8[65536]{0}', space=vmem, size = 0x10000, scoped, tag = 'input window, operand 5, single buffered']
    #allocation9 [shape = 's32[1]{0}', space=sflag, size = 0x4, scoped, tag = 'scoped memory for tpu_custom_call.1']
    #allocation10 [shape = 'u8[8192]{0}', space=vmem, size = 0x2000, scoped, tag = 'output window, operand 0, single buffered']
    %12 = vsyncpa [#allocation3], 0
    %13 = vsyncpa [#allocation6], 0
    %14 = vsyncpa [#allocation9], 0
    %15 = vsyncpa [#allocation4], 0
    // Predicated region
    $region2: #{tpu_custom_call.1} parent=1 // pred_check
      _
    $region3: #{tpu_custom_call.1} parent=1 // pred_check_branch
      %17 = sbr.rel (0) target = $region5
    $region4: #{tpu_custom_call.1} parent=1 // pred_region
      %19 = vsyncadd [#allocation3], 0
      %s20 = sshll.u32 %s0, 4
      %s21 = int_to_ptr.hbm [resolvable:$true] %s20
      %s22 = sshll.u32 [#allocation2], 4
      %s23 = int_to_ptr.vmem [resolvable:$true] %s22
      %28 = dma.hbm_to_vmem [thread:$0]  %s21, 256, %s23, [#allocation3], 128, 128, 8
    $region5: #{tpu_custom_call.1} parent=1 // pred_fallthru
      _
    // Predicated region
    $region6: #{tpu_custom_call.1} parent=1 // pred_check
      _
    $region7: #{tpu_custom_call.1} parent=1 // pred_check_branch
      %30 = sbr.rel (0) target = $region9
    $region8: #{tpu_custom_call.1} parent=1 // pred_region
      %32 = vsyncadd [#allocation6], 0
      %s33 = sshll.u32 %s1, 4
      %s34 = int_to_ptr.hbm [resolvable:$true] %s33
      %s35 = sshll.u32 [#allocation5], 4
      %s36 = int_to_ptr.vmem [resolvable:$true] %s35
      %41 = dma.hbm_to_vmem [thread:$0]  %s34, 2048, %s36, [#allocation6], 128, 128, 8
    $region9: #{tpu_custom_call.1} parent=1 // pred_fallthru
      _
    // Predicated region
    $region10: #{tpu_custom_call.1} parent=1 // pred_check
      _
    $region11: #{tpu_custom_call.1} parent=1 // pred_check_branch
      %43 = sbr.rel (0) target = $region13
    $region12: #{tpu_custom_call.1} parent=1 // pred_region
      _
    $region13: #{tpu_custom_call.1} parent=1 // pred_fallthru
      _
    // Predicated region
    $region14: #{tpu_custom_call.1} parent=1 // pred_check
      _
    $region15: #{tpu_custom_call.1} parent=1 // pred_check_branch
      %45 = sbr.rel (0) target = $region17
    $region16: #{tpu_custom_call.1} parent=1 // pred_region
      %47 = vsyncadd [#allocation6], 0
      %s48 = sshll.u32 %s3, 4
      %s49 = int_to_ptr.hbm [resolvable:$true] %s48
      %s50 = sshll.u32 [#allocation7], 4
      %s51 = int_to_ptr.vmem [resolvable:$true] %s50
      %56 = dma.hbm_to_vmem [thread:$0]  %s49, 2048, %s51, [#allocation6], 128, 128, 8
    $region17: #{tpu_custom_call.1} parent=1 // pred_fallthru
      _
    // Predicated region
    $region18: #{tpu_custom_call.1} parent=1 // pred_check
      _
    $region19: #{tpu_custom_call.1} parent=1 // pred_check_branch
      %58 = sbr.rel (0) target = $region21
    $region20: #{tpu_custom_call.1} parent=1 // pred_region
      _
    $region21: #{tpu_custom_call.1} parent=1 // pred_fallthru
      _
    // Predicated region
    $region22: #{tpu_custom_call.1} parent=1 // pred_check
      _
    $region23: #{tpu_custom_call.1} parent=1 // pred_check_branch
      %60 = sbr.rel (0) target = $region25
    $region24: #{tpu_custom_call.1} parent=1 // pred_region
      %62 = vsyncadd [#allocation9], 0
      %s63 = sshll.u32 %s5, 4
      %s64 = int_to_ptr.hbm [resolvable:$true] %s63
      %s65 = sshll.u32 [#allocation8], 4
      %s66 = int_to_ptr.vmem [resolvable:$true] %s65
      %71 = dma.hbm_to_vmem [thread:$0]  %s64, 2048, %s66, [#allocation9], 128, 128, 8
    $region25: #{tpu_custom_call.1} parent=1 // pred_fallthru
      _
    // Predicated region
    $region26: #{tpu_custom_call.1} parent=1 // pred_check
      _
    $region27: #{tpu_custom_call.1} parent=1 // pred_check_branch
      %73 = sbr.rel (0) target = $region29
    $region28: #{tpu_custom_call.1} parent=1 // pred_region
      _
    $region29: #{tpu_custom_call.1} parent=1 // pred_fallthru
      _
    // Predicated region
    $region30: #{tpu_custom_call.1} parent=1 // pred_check
      _
    $region31: #{tpu_custom_call.1} parent=1 // pred_check_branch
      %75 = sbr.rel (0) target = $region33
    $region32: #{tpu_custom_call.1} parent=1 // pred_region
      %77 = dma.done [#allocation3], 256
    $region33: #{tpu_custom_call.1} parent=1 // pred_fallthru
      _
    // Predicated region
    $region34: #{tpu_custom_call.1} parent=1 // pred_check
      _
    $region35: #{tpu_custom_call.1} parent=1 // pred_check_branch
      %79 = sbr.rel (0) target = $region37
    $region36: #{tpu_custom_call.1} parent=1 // pred_region
      %81 = dma.done [#allocation6], 2048
    $region37: #{tpu_custom_call.1} parent=1 // pred_fallthru
      _
    // Predicated region
    $region38: #{tpu_custom_call.1} parent=1 // pred_check
      _
    $region39: #{tpu_custom_call.1} parent=1 // pred_check_branch
      %83 = sbr.rel (0) target = $region41
    $region40: #{tpu_custom_call.1} parent=1 // pred_region
      %85 = dma.done [#allocation6], 2048
    $region41: #{tpu_custom_call.1} parent=1 // pred_fallthru
      _
    // Predicated region
    $region42: #{tpu_custom_call.1} parent=1 // pred_check
      _
    $region43: #{tpu_custom_call.1} parent=1 // pred_check_branch
      %87 = sbr.rel (0) target = $region45
    $region44: #{tpu_custom_call.1} parent=1 // pred_region
      %89 = dma.done [#allocation9], 2048
    $region45: #{tpu_custom_call.1} parent=1 // pred_fallthru
      _
    %v90 = vld [vmem:[#allocation2] sm:$0xff]
    %v91 = vld [vmem:[#allocation2 + $0x8] sm:$0xff]
    %v92 = vld [vmem:[#allocation5] sm:$0xff]
    %v93 = vld [vmem:[#allocation5 + $0x8] sm:$0xff]
    %v94 = vld [vmem:[#allocation5 + $0x10] sm:$0xff]
    %v95 = vld [vmem:[#allocation5 + $0x18] sm:$0xff]
    %v96 = vld [vmem:[#allocation5 + $0x20] sm:$0xff]
    %v97 = vld [vmem:[#allocation5 + $0x28] sm:$0xff]
    %v98 = vld [vmem:[#allocation5 + $0x30] sm:$0xff]
    %v99 = vld [vmem:[#allocation5 + $0x38] sm:$0xff]
    %v100 = vld [vmem:[#allocation5 + $0x40] sm:$0xff]
    %v101 = vld [vmem:[#allocation5 + $0x48] sm:$0xff]
    %v102 = vld [vmem:[#allocation5 + $0x50] sm:$0xff]
    %v103 = vld [vmem:[#allocation5 + $0x58] sm:$0xff]
    %v104 = vld [vmem:[#allocation5 + $0x60] sm:$0xff]
    %v105 = vld [vmem:[#allocation5 + $0x68] sm:$0xff]
    %v106 = vld [vmem:[#allocation5 + $0x70] sm:$0xff]
    %v107 = vld [vmem:[#allocation5 + $0x78] sm:$0xff]
    %v108 = vld [vmem:[%s2] sm:$0x1]
    %v110 = vperm.slane %v108, 0
    %112 = vmatpush.msra.mxu0 %v107
    %113 = vmatpush.msra.mxu0 %v106
    %114 = vmatpush.msra.mxu0 %v105
    %115 = vmatpush.msra.mxu0 %v104
    %116 = vmatpush.msra.mxu0 %v103
    %117 = vmatpush.msra.mxu0 %v102
    %118 = vmatpush.msra.mxu0 %v101
    %119 = vmatpush.msra.mxu0 %v100
    %120 = vmatpush.msra.mxu0 %v99
    %121 = vmatpush.msra.mxu0 %v98
    %122 = vmatpush.msra.mxu0 %v97
    %123 = vmatpush.msra.mxu0 %v96
    %124 = vmatpush.msra.mxu0 %v95
    %125 = vmatpush.msra.mxu0 %v94
    %126 = vmatpush.msra.mxu0 %v93
    %127 = vmatpush.msra.mxu0 %v92
    %128 = vmatmul.f32.gmra.mxu0 %v90
    %v129 = vpop.f32.mrf.mxu0
    %v130 = vadd.f32 %v110, %v129
    %131 = vmatmul.f32.gmra.mxu0 %v91
    %v132 = vpop.f32.mrf.mxu0
    %v133 = vadd.f32 %v110, %v132
    %134 = vdwg.mxu0
    %v135 = vxor.u32 %v130, 2147483648
    %v136 = vxor.u32 %v133, 2147483648
    %v137 = vmul.f32 %v135, 1.442695
    %v138 = vpow.pop %v137
    %v139 = vmul.f32 %v136, 1.442695
    %v140 = vpow.pop %v139
    %v141 = vadd.f32 %v138, 1.0
    %v142 = vadd.f32 %v140, 1.0
    %v143 = vrcp.pop %v141
    %v144 = vmul.f32 %v141, %v143
    %v145 = vsub.f32 1.0, %v144
    %v146 = vmul.f32 %v143, %v145
    %v147 = vadd.f32 %v143, %v146
    %vm148 = vweird.f32 %v141
    %vm149 = vweird.f32 %v143
    %vm150 = vmor %vm148, %vm149
    %v151 = vsel %vm150, %v143, %v147
    %v152 = vand.u32 2147483647, %v141
    %vm153 = vcmp.eq.f32.partialorder %v152, 8.507059e+37
    %v154 = vand.u32 %v141, 2147483648
    %v155 = vor.u32 1.1754944e-38, %v154
    %v156 = vsel %vm153, %v155, %v151
    %v157 = vmul.f32 1.0, %v156
    %v158 = vrcp.pop %v142
    %v159 = vmul.f32 %v142, %v158
    %v160 = vsub.f32 1.0, %v159
    %v161 = vmul.f32 %v158, %v160
    %v162 = vadd.f32 %v158, %v161
    %vm163 = vweird.f32 %v142
    %vm164 = vweird.f32 %v158
    %vm165 = vmor %vm163, %vm164
    %v166 = vsel %vm165, %v158, %v162
    %v167 = vand.u32 2147483647, %v142
    %vm168 = vcmp.eq.f32.partialorder %v167, 8.507059e+37
    %v169 = vand.u32 %v142, 2147483648
    %v170 = vor.u32 1.1754944e-38, %v169
    %v171 = vsel %vm168, %v170, %v166
    %v172 = vmul.f32 1.0, %v171
    %v173 = vld [vmem:[#allocation7] sm:$0xff]
    %v174 = vld [vmem:[#allocation7 + $0x8] sm:$0xff]
    %v175 = vld [vmem:[#allocation7 + $0x10] sm:$0xff]
    %v176 = vld [vmem:[#allocation7 + $0x18] sm:$0xff]
    %v177 = vld [vmem:[#allocation7 + $0x20] sm:$0xff]
    %v178 = vld [vmem:[#allocation7 + $0x28] sm:$0xff]
    %v179 = vld [vmem:[#allocation7 + $0x30] sm:$0xff]
    %v180 = vld [vmem:[#allocation7 + $0x38] sm:$0xff]
    %v181 = vld [vmem:[#allocation7 + $0x40] sm:$0xff]
    %v182 = vld [vmem:[#allocation7 + $0x48] sm:$0xff]
    %v183 = vld [vmem:[#allocation7 + $0x50] sm:$0xff]
    %v184 = vld [vmem:[#allocation7 + $0x58] sm:$0xff]
    %v185 = vld [vmem:[#allocation7 + $0x60] sm:$0xff]
    %v186 = vld [vmem:[#allocation7 + $0x68] sm:$0xff]
    %v187 = vld [vmem:[#allocation7 + $0x70] sm:$0xff]
    %v188 = vld [vmem:[#allocation7 + $0x78] sm:$0xff]
    %v189 = vld [vmem:[%s4] sm:$0x1]
    %v191 = vperm.slane %v189, 0
    %193 = vmatpush.msra.mxu0 %v188
    %194 = vmatpush.msra.mxu0 %v187
    %195 = vmatpush.msra.mxu0 %v186
    %196 = vmatpush.msra.mxu0 %v185
    %197 = vmatpush.msra.mxu0 %v184
    %198 = vmatpush.msra.mxu0 %v183
    %199 = vmatpush.msra.mxu0 %v182
    %200 = vmatpush.msra.mxu0 %v181
    %201 = vmatpush.msra.mxu0 %v180
    %202 = vmatpush.msra.mxu0 %v179
    %203 = vmatpush.msra.mxu0 %v178
    %204 = vmatpush.msra.mxu0 %v177
    %205 = vmatpush.msra.mxu0 %v176
    %206 = vmatpush.msra.mxu0 %v175
    %207 = vmatpush.msra.mxu0 %v174
    %208 = vmatpush.msra.mxu0 %v173
    %209 = vmatmul.f32.gmra.mxu0 %v157
    %v210 = vpop.f32.mrf.mxu0
    %v211 = vadd.f32 %v191, %v210
    %212 = vmatmul.f32.gmra.mxu0 %v172
    %v213 = vpop.f32.mrf.mxu0
    %v214 = vadd.f32 %v191, %v213
    %215 = vdwg.mxu0
    %v216 = vxor.u32 %v211, 2147483648
    %v217 = vxor.u32 %v214, 2147483648
    %v218 = vmul.f32 %v216, 1.442695
    %v219 = vpow.pop %v218
    %v220 = vmul.f32 %v217, 1.442695
    %v221 = vpow.pop %v220
    %v222 = vadd.f32 %v219, 1.0
    %v223 = vadd.f32 %v221, 1.0
    %v224 = vrcp.pop %v222
    %v225 = vmul.f32 %v222, %v224
    %v226 = vsub.f32 1.0, %v225
    %v227 = vmul.f32 %v224, %v226
    %v228 = vadd.f32 %v224, %v227
    %vm229 = vweird.f32 %v222
    %vm230 = vweird.f32 %v224
    %vm231 = vmor %vm229, %vm230
    %v232 = vsel %vm231, %v224, %v228
    %v233 = vand.u32 2147483647, %v222
    %vm234 = vcmp.eq.f32.partialorder %v233, 8.507059e+37
    %v235 = vand.u32 %v222, 2147483648
    %v236 = vor.u32 1.1754944e-38, %v235
    %v237 = vsel %vm234, %v236, %v232
    %v238 = vmul.f32 1.0, %v237
    %v239 = vrcp.pop %v223
    %v240 = vmul.f32 %v223, %v239
    %v241 = vsub.f32 1.0, %v240
    %v242 = vmul.f32 %v239, %v241
    %v243 = vadd.f32 %v239, %v242
    %vm244 = vweird.f32 %v223
    %vm245 = vweird.f32 %v239
    %vm246 = vmor %vm244, %vm245
    %v247 = vsel %vm246, %v239, %v243
    %v248 = vand.u32 2147483647, %v223
    %vm249 = vcmp.eq.f32.partialorder %v248, 8.507059e+37
    %v250 = vand.u32 %v223, 2147483648
    %v251 = vor.u32 1.1754944e-38, %v250
    %v252 = vsel %vm249, %v251, %v247
    %v253 = vmul.f32 1.0, %v252
    %v254 = vld [vmem:[#allocation8] sm:$0xff]
    %v255 = vld [vmem:[#allocation8 + $0x8] sm:$0xff]
    %v256 = vld [vmem:[#allocation8 + $0x10] sm:$0xff]
    %v257 = vld [vmem:[#allocation8 + $0x18] sm:$0xff]
    %v258 = vld [vmem:[#allocation8 + $0x20] sm:$0xff]
    %v259 = vld [vmem:[#allocation8 + $0x28] sm:$0xff]
    %v260 = vld [vmem:[#allocation8 + $0x30] sm:$0xff]
    %v261 = vld [vmem:[#allocation8 + $0x38] sm:$0xff]
    %v262 = vld [vmem:[#allocation8 + $0x40] sm:$0xff]
    %v263 = vld [vmem:[#allocation8 + $0x48] sm:$0xff]
    %v264 = vld [vmem:[#allocation8 + $0x50] sm:$0xff]
    %v265 = vld [vmem:[#allocation8 + $0x58] sm:$0xff]
    %v266 = vld [vmem:[#allocation8 + $0x60] sm:$0xff]
    %v267 = vld [vmem:[#allocation8 + $0x68] sm:$0xff]
    %v268 = vld [vmem:[#allocation8 + $0x70] sm:$0xff]
    %v269 = vld [vmem:[#allocation8 + $0x78] sm:$0xff]
    %v270 = vld [vmem:[%s6] sm:$0x1]
    %v272 = vperm.slane %v270, 0
    %274 = vmatpush.msra.mxu0 %v269
    %275 = vmatpush.msra.mxu0 %v268
    %276 = vmatpush.msra.mxu0 %v267
    %277 = vmatpush.msra.mxu0 %v266
    %278 = vmatpush.msra.mxu0 %v265
    %279 = vmatpush.msra.mxu0 %v264
    %280 = vmatpush.msra.mxu0 %v263
    %281 = vmatpush.msra.mxu0 %v262
    %282 = vmatpush.msra.mxu0 %v261
    %283 = vmatpush.msra.mxu0 %v260
    %284 = vmatpush.msra.mxu0 %v259
    %285 = vmatpush.msra.mxu0 %v258
    %286 = vmatpush.msra.mxu0 %v257
    %287 = vmatpush.msra.mxu0 %v256
    %288 = vmatpush.msra.mxu0 %v255
    %289 = vmatpush.msra.mxu0 %v254
    %290 = vmatmul.f32.gmra.mxu0 %v238
    %v291 = vpop.f32.mrf.mxu0
    %v292 = vadd.f32 %v272, %v291
    %293 = vmatmul.f32.gmra.mxu0 %v253
    %v294 = vpop.f32.mrf.mxu0
    %v295 = vadd.f32 %v272, %v294
    %296 = vdwg.mxu0
    %297 = vst [vmem:[#allocation10] sm:$0xff] %v292
    %298 = vst [vmem:[#allocation10 + $0x8] sm:$0xff] %v295
    // Predicated region
    $region46: #{tpu_custom_call.1} parent=1 // pred_check
      _
    $region47: #{tpu_custom_call.1} parent=1 // pred_check_branch
      %300 = sbr.rel (0) target = $region49
    $region48: #{tpu_custom_call.1} parent=1 // pred_region
      %302 = vsyncadd [#allocation4], 0
      %s303 = sshll.u32 [#allocation10], 4
      %s304 = int_to_ptr.vmem [resolvable:$true] %s303
      %s305 = sshll.u32 %s7, 4
      %s306 = int_to_ptr.hbm [resolvable:$true] %s305
      %311 = dma.vmem_to_hbm [thread:$0]  %s304, 256, %s306, [#allocation4], 128, 128, 8
    $region49: #{tpu_custom_call.1} parent=1 // pred_fallthru
      _
    // Predicated region
    $region50: #{tpu_custom_call.1} parent=1 // pred_check
      _
    $region51: #{tpu_custom_call.1} parent=1 // pred_check_branch
      %313 = sbr.rel (0) target = $region53
    $region52: #{tpu_custom_call.1} parent=1 // pred_region
      %315 = dma.done [#allocation4], 256
    $region53: #{tpu_custom_call.1} parent=1 // pred_fallthru
      _
    %316 = vsyncpa [#allocation3], 1
    %317 = vsyncpa [#allocation6], 1
    %318 = vsyncpa [#allocation9], 1
    %319 = vsyncpa [#allocation4], 1

// kernel: tpu_custom_call.1
$region0: #{tpu_custom_call.1}
  #allocation0 [shape = 'u32[]', space=smem, size = 0x4, offset = 0x4, fixed_abs, tag = 'smem constant byte address 0x4 - core index']
  #allocation1 [shape = 'u32[72,128]{1,0:T(1,128)}', space=vmem, size = 0x9000, scoped, tag = 'internal scratch']
  %s0 = inlined_call_operand.hbm [shape: f32[16,128], index: 0, kind: input, shape index: {}]
  %s1 = inlined_call_operand.hbm [shape: f32[128,128], index: 1, kind: input, shape index: {}]
  %s2 = inlined_call_operand.vmem [shape: f32[1,128], index: 2, kind: input, shape index: {}]
  %s3 = inlined_call_operand.hbm [shape: f32[128,128], index: 3, kind: input, shape index: {}]
  %s4 = inlined_call_operand.vmem [shape: f32[1,128], index: 4, kind: input, shape index: {}]
  %s5 = inlined_call_operand.hbm [shape: f32[128,128], index: 5, kind: input, shape index: {}]
  %s6 = inlined_call_operand.vmem [shape: f32[1,128], index: 6, kind: input, shape index: {}]
  %s7 = inlined_call_operand.hbm [shape: f32[16,128], index: 7, kind: output, shape index: {}]
  %s8 = sld [smem:[#allocation0]]
  $region54: #{tpu_custom_call.1} parent=0
    _
  %s10 = ssub.s32 1, %s8
  %s11 = scalar_select 0, %s10, %s8
  $region1: #{tpu_custom_call.1} parent=0
    #allocation2 [shape = 'u8[8192]{0}', space=vmem, size = 0x2000, scoped, tag = 'input window, operand 0, single buffered']
    #allocation3 [shape = 's32[1]{0}', space=sflag, size = 0x4, scoped, tag = 'scoped memory for tpu_custom_call.1']
    #allocation4 [shape = 's32[1]{0}', space=sflag, size = 0x4, scoped, tag = 'scoped memory for tpu_custom_call.1']
    #allocation5 [shape = 'u8[65536]{0}', space=vmem, size = 0x10000, scoped, tag = 'input window, operand 1, single buffered']
    #allocation6 [shape = 's32[1]{0}', space=sflag, size = 0x4, scoped, tag = 'scoped memory for tpu_custom_call.1']
    #allocation7 [shape = 'u8[65536]{0}', space=vmem, size = 0x10000, scoped, tag = 'input window, operand 3, single buffered']
    #allocation8 [shape = 'u8[65536]{0}', space=vmem, size = 0x10000, scoped, tag = 'input window, operand 5, single buffered']
    #allocation9 [shape = 's32[1]{0}', space=sflag, size = 0x4, scoped, tag = 'scoped memory for tpu_custom_call.1']
    #allocation10 [shape = 'u8[8192]{0}', space=vmem, size = 0x2000, scoped, tag = 'output window, operand 0, single buffered']
    %12 = vsyncpa [#allocation3], 0
    %13 = vsyncpa [#allocation6], 0
    %14 = vsyncpa [#allocation9], 0
    %15 = vsyncpa [#allocation4], 0
    // Predicated region
    $region2: #{tpu_custom_call.1} parent=1 // pred_check
      _
    $region3: #{tpu_custom_call.1} parent=1 // pred_check_branch
      %17 = sbr.rel (0) target = $region5
    $region4: #{tpu_custom_call.1} parent=1 // pred_region
      %19 = vsyncadd [#allocation3], 0
      %s20 = sshll.u32 %s0, 4
      %s21 = int_to_ptr.hbm [resolvable:$true] %s20
      %s22 = sshll.u32 [#allocation2], 4
      %s23 = int_to_ptr.vmem [resolvable:$true] %s22
      %28 = dma.hbm_to_vmem [thread:$0]  %s21, 256, %s23, [#allocation3], 128, 128, 8
    $region5: #{tpu_custom_call.1} parent=1 // pred_fallthru
      _
    // Predicated region
    $region6: #{tpu_custom_call.1} parent=1 // pred_check
      _
    $region7: #{tpu_custom_call.1} parent=1 // pred_check_branch
      %30 = sbr.rel (0) target = $region9
    $region8: #{tpu_custom_call.1} parent=1 // pred_region
      %32 = vsyncadd [#allocation6], 0
      %s33 = sshll.u32 %s1, 4
      %s34 = int_to_ptr.hbm [resolvable:$true] %s33
      %s35 = sshll.u32 [#allocation5], 4
      %s36 = int_to_ptr.vmem [resolvable:$true] %s35
      %41 = dma.hbm_to_vmem [thread:$0]  %s34, 2048, %s36, [#allocation6], 128, 128, 8
    $region9: #{tpu_custom_call.1} parent=1 // pred_fallthru
      _
    // Predicated region
    $region10: #{tpu_custom_call.1} parent=1 // pred_check
      _
    $region11: #{tpu_custom_call.1} parent=1 // pred_check_branch
      %43 = sbr.rel (0) target = $region13
    $region12: #{tpu_custom_call.1} parent=1 // pred_region
      _
    $region13: #{tpu_custom_call.1} parent=1 // pred_fallthru
      _
    // Predicated region
    $region14: #{tpu_custom_call.1} parent=1 // pred_check
      _
    $region15: #{tpu_custom_call.1} parent=1 // pred_check_branch
      %45 = sbr.rel (0) target = $region17
    $region16: #{tpu_custom_call.1} parent=1 // pred_region
      %47 = vsyncadd [#allocation6], 0
      %s48 = sshll.u32 %s3, 4
      %s49 = int_to_ptr.hbm [resolvable:$true] %s48
      %s50 = sshll.u32 [#allocation7], 4
      %s51 = int_to_ptr.vmem [resolvable:$true] %s50
      %56 = dma.hbm_to_vmem [thread:$0]  %s49, 2048, %s51, [#allocation6], 128, 128, 8
    $region17: #{tpu_custom_call.1} parent=1 // pred_fallthru
      _
    // Predicated region
    $region18: #{tpu_custom_call.1} parent=1 // pred_check
      _
    $region19: #{tpu_custom_call.1} parent=1 // pred_check_branch
      %58 = sbr.rel (0) target = $region21
    $region20: #{tpu_custom_call.1} parent=1 // pred_region
      _
    $region21: #{tpu_custom_call.1} parent=1 // pred_fallthru
      _
    // Predicated region
    $region22: #{tpu_custom_call.1} parent=1 // pred_check
      _
    $region23: #{tpu_custom_call.1} parent=1 // pred_check_branch
      %60 = sbr.rel (0) target = $region25
    $region24: #{tpu_custom_call.1} parent=1 // pred_region
      %62 = vsyncadd [#allocation9], 0
      %s63 = sshll.u32 %s5, 4
      %s64 = int_to_ptr.hbm [resolvable:$true] %s63
      %s65 = sshll.u32 [#allocation8], 4
      %s66 = int_to_ptr.vmem [resolvable:$true] %s65
      %71 = dma.hbm_to_vmem [thread:$0]  %s64, 2048, %s66, [#allocation9], 128, 128, 8
    $region25: #{tpu_custom_call.1} parent=1 // pred_fallthru
      _
    // Predicated region
    $region26: #{tpu_custom_call.1} parent=1 // pred_check
      _
    $region27: #{tpu_custom_call.1} parent=1 // pred_check_branch
      %73 = sbr.rel (0) target = $region29
    $region28: #{tpu_custom_call.1} parent=1 // pred_region
      _
    $region29: #{tpu_custom_call.1} parent=1 // pred_fallthru
      _
    // Predicated region
    $region30: #{tpu_custom_call.1} parent=1 // pred_check
      _
    $region31: #{tpu_custom_call.1} parent=1 // pred_check_branch
      %75 = sbr.rel (0) target = $region33
    $region32: #{tpu_custom_call.1} parent=1 // pred_region
      %77 = dma.done [#allocation3], 256
    $region33: #{tpu_custom_call.1} parent=1 // pred_fallthru
      _
    // Predicated region
    $region34: #{tpu_custom_call.1} parent=1 // pred_check
      _
    $region35: #{tpu_custom_call.1} parent=1 // pred_check_branch
      %79 = sbr.rel (0) target = $region37
    $region36: #{tpu_custom_call.1} parent=1 // pred_region
      %81 = dma.done [#allocation6], 2048
    $region37: #{tpu_custom_call.1} parent=1 // pred_fallthru
      _
    // Predicated region
    $region38: #{tpu_custom_call.1} parent=1 // pred_check
      _
    $region39: #{tpu_custom_call.1} parent=1 // pred_check_branch
      %83 = sbr.rel (0) target = $region41
    $region40: #{tpu_custom_call.1} parent=1 // pred_region
      %85 = dma.done [#allocation6], 2048
    $region41: #{tpu_custom_call.1} parent=1 // pred_fallthru
      _
    // Predicated region
    $region42: #{tpu_custom_call.1} parent=1 // pred_check
      _
    $region43: #{tpu_custom_call.1} parent=1 // pred_check_branch
      %87 = sbr.rel (0) target = $region45
    $region44: #{tpu_custom_call.1} parent=1 // pred_region
      %89 = dma.done [#allocation9], 2048
    $region45: #{tpu_custom_call.1} parent=1 // pred_fallthru
      _
    %v90 = vld [vmem:[#allocation2] sm:$0xff]
    %v91 = vld [vmem:[#allocation2 + $0x8] sm:$0xff]
    %v92 = vld [vmem:[#allocation5] sm:$0xff]
    %v93 = vld [vmem:[#allocation5 + $0x8] sm:$0xff]
    %v94 = vld [vmem:[#allocation5 + $0x10] sm:$0xff]
    %v95 = vld [vmem:[#allocation5 + $0x18] sm:$0xff]
    %v96 = vld [vmem:[#allocation5 + $0x20] sm:$0xff]
    %v97 = vld [vmem:[#allocation5 + $0x28] sm:$0xff]
    %v98 = vld [vmem:[#allocation5 + $0x30] sm:$0xff]
    %v99 = vld [vmem:[#allocation5 + $0x38] sm:$0xff]
    %v100 = vld [vmem:[#allocation5 + $0x40] sm:$0xff]
    %v101 = vld [vmem:[#allocation5 + $0x48] sm:$0xff]
    %v102 = vld [vmem:[#allocation5 + $0x50] sm:$0xff]
    %v103 = vld [vmem:[#allocation5 + $0x58] sm:$0xff]
    %v104 = vld [vmem:[#allocation5 + $0x60] sm:$0xff]
    %v105 = vld [vmem:[#allocation5 + $0x68] sm:$0xff]
    %v106 = vld [vmem:[#allocation5 + $0x70] sm:$0xff]
    %v107 = vld [vmem:[#allocation5 + $0x78] sm:$0xff]
    %v108 = vld [vmem:[%s2] sm:$0x1]
    %v110 = vperm.slane %v108, 0
    %112 = vmatpush.msra.mxu0 %v107
    %113 = vmatpush.msra.mxu0 %v106
    %114 = vmatpush.msra.mxu0 %v105
    %115 = vmatpush.msra.mxu0 %v104
    %116 = vmatpush.msra.mxu0 %v103
    %117 = vmatpush.msra.mxu0 %v102
    %118 = vmatpush.msra.mxu0 %v101
    %119 = vmatpush.msra.mxu0 %v100
    %120 = vmatpush.msra.mxu0 %v99
    %121 = vmatpush.msra.mxu0 %v98
    %122 = vmatpush.msra.mxu0 %v97
    %123 = vmatpush.msra.mxu0 %v96
    %124 = vmatpush.msra.mxu0 %v95
    %125 = vmatpush.msra.mxu0 %v94
    %126 = vmatpush.msra.mxu0 %v93
    %127 = vmatpush.msra.mxu0 %v92
    %128 = vmatmul.f32.gmra.mxu0 %v90
    %v129 = vpop.f32.mrf.mxu0
    %v130 = vadd.f32 %v110, %v129
    %131 = vmatmul.f32.gmra.mxu0 %v91
    %v132 = vpop.f32.mrf.mxu0
    %v133 = vadd.f32 %v110, %v132
    %134 = vdwg.mxu0
    %v135 = vxor.u32 %v130, 2147483648
    %v136 = vxor.u32 %v133, 2147483648
    %v137 = vmul.f32 %v135, 1.442695
    %v138 = vpow.pop %v137
    %v139 = vmul.f32 %v136, 1.442695
    %v140 = vpow.pop %v139
    %v141 = vadd.f32 %v138, 1.0
    %v142 = vadd.f32 %v140, 1.0
    %v143 = vrcp.pop %v141
    %v144 = vmul.f32 %v141, %v143
    %v145 = vsub.f32 1.0, %v144
    %v146 = vmul.f32 %v143, %v145
    %v147 = vadd.f32 %v143, %v146
    %vm148 = vweird.f32 %v141
    %vm149 = vweird.f32 %v143
    %vm150 = vmor %vm148, %vm149
    %v151 = vsel %vm150, %v143, %v147
    %v152 = vand.u32 2147483647, %v141
    %vm153 = vcmp.eq.f32.partialorder %v152, 8.507059e+37
    %v154 = vand.u32 %v141, 2147483648
    %v155 = vor.u32 1.1754944e-38, %v154
    %v156 = vsel %vm153, %v155, %v151
    %v157 = vmul.f32 1.0, %v156
    %v158 = vrcp.pop %v142
    %v159 = vmul.f32 %v142, %v158
    %v160 = vsub.f32 1.0, %v159
    %v161 = vmul.f32 %v158, %v160
    %v162 = vadd.f32 %v158, %v161
    %vm163 = vweird.f32 %v142
    %vm164 = vweird.f32 %v158
    %vm165 = vmor %vm163, %vm164
    %v166 = vsel %vm165, %v158, %v162
    %v167 = vand.u32 2147483647, %v142
    %vm168 = vcmp.eq.f32.partialorder %v167, 8.507059e+37
    %v169 = vand.u32 %v142, 2147483648
    %v170 = vor.u32 1.1754944e-38, %v169
    %v171 = vsel %vm168, %v170, %v166
    %v172 = vmul.f32 1.0, %v171
    %v173 = vld [vmem:[#allocation7] sm:$0xff]
    %v174 = vld [vmem:[#allocation7 + $0x8] sm:$0xff]
    %v175 = vld [vmem:[#allocation7 + $0x10] sm:$0xff]
    %v176 = vld [vmem:[#allocation7 + $0x18] sm:$0xff]
    %v177 = vld [vmem:[#allocation7 + $0x20] sm:$0xff]
    %v178 = vld [vmem:[#allocation7 + $0x28] sm:$0xff]
    %v179 = vld [vmem:[#allocation7 + $0x30] sm:$0xff]
    %v180 = vld [vmem:[#allocation7 + $0x38] sm:$0xff]
    %v181 = vld [vmem:[#allocation7 + $0x40] sm:$0xff]
    %v182 = vld [vmem:[#allocation7 + $0x48] sm:$0xff]
    %v183 = vld [vmem:[#allocation7 + $0x50] sm:$0xff]
    %v184 = vld [vmem:[#allocation7 + $0x58] sm:$0xff]
    %v185 = vld [vmem:[#allocation7 + $0x60] sm:$0xff]
    %v186 = vld [vmem:[#allocation7 + $0x68] sm:$0xff]
    %v187 = vld [vmem:[#allocation7 + $0x70] sm:$0xff]
    %v188 = vld [vmem:[#allocation7 + $0x78] sm:$0xff]
    %v189 = vld [vmem:[%s4] sm:$0x1]
    %v191 = vperm.slane %v189, 0
    %193 = vmatpush.msra.mxu0 %v188
    %194 = vmatpush.msra.mxu0 %v187
    %195 = vmatpush.msra.mxu0 %v186
    %196 = vmatpush.msra.mxu0 %v185
    %197 = vmatpush.msra.mxu0 %v184
    %198 = vmatpush.msra.mxu0 %v183
    %199 = vmatpush.msra.mxu0 %v182
    %200 = vmatpush.msra.mxu0 %v181
    %201 = vmatpush.msra.mxu0 %v180
    %202 = vmatpush.msra.mxu0 %v179
    %203 = vmatpush.msra.mxu0 %v178
    %204 = vmatpush.msra.mxu0 %v177
    %205 = vmatpush.msra.mxu0 %v176
    %206 = vmatpush.msra.mxu0 %v175
    %207 = vmatpush.msra.mxu0 %v174
    %208 = vmatpush.msra.mxu0 %v173
    %209 = vmatmul.f32.gmra.mxu0 %v157
    %v210 = vpop.f32.mrf.mxu0
    %v211 = vadd.f32 %v191, %v210
    %212 = vmatmul.f32.gmra.mxu0 %v172
    %v213 = vpop.f32.mrf.mxu0
    %v214 = vadd.f32 %v191, %v213
    %215 = vdwg.mxu0
    %v216 = vxor.u32 %v211, 2147483648
    %v217 = vxor.u32 %v214, 2147483648
    %v218 = vmul.f32 %v216, 1.442695
    %v219 = vpow.pop %v218
    %v220 = vmul.f32 %v217, 1.442695
    %v221 = vpow.pop %v220
    %v222 = vadd.f32 %v219, 1.0
    %v223 = vadd.f32 %v221, 1.0
    %v224 = vrcp.pop %v222
    %v225 = vmul.f32 %v222, %v224
    %v226 = vsub.f32 1.0, %v225
    %v227 = vmul.f32 %v224, %v226
    %v228 = vadd.f32 %v224, %v227
    %vm229 = vweird.f32 %v222
    %vm230 = vweird.f32 %v224
    %vm231 = vmor %vm229, %vm230
    %v232 = vsel %vm231, %v224, %v228
    %v233 = vand.u32 2147483647, %v222
    %vm234 = vcmp.eq.f32.partialorder %v233, 8.507059e+37
    %v235 = vand.u32 %v222, 2147483648
    %v236 = vor.u32 1.1754944e-38, %v235
    %v237 = vsel %vm234, %v236, %v232
    %v238 = vmul.f32 1.0, %v237
    %v239 = vrcp.pop %v223
    %v240 = vmul.f32 %v223, %v239
    %v241 = vsub.f32 1.0, %v240
    %v242 = vmul.f32 %v239, %v241
    %v243 = vadd.f32 %v239, %v242
    %vm244 = vweird.f32 %v223
    %vm245 = vweird.f32 %v239
    %vm246 = vmor %vm244, %vm245
    %v247 = vsel %vm246, %v239, %v243
    %v248 = vand.u32 2147483647, %v223
    %vm249 = vcmp.eq.f32.partialorder %v248, 8.507059e+37
    %v250 = vand.u32 %v223, 2147483648
    %v251 = vor.u32 1.1754944e-38, %v250
    %v252 = vsel %vm249, %v251, %v247
    %v253 = vmul.f32 1.0, %v252
    %v254 = vld [vmem:[#allocation8] sm:$0xff]
    %v255 = vld [vmem:[#allocation8 + $0x8] sm:$0xff]
    %v256 = vld [vmem:[#allocation8 + $0x10] sm:$0xff]
    %v257 = vld [vmem:[#allocation8 + $0x18] sm:$0xff]
    %v258 = vld [vmem:[#allocation8 + $0x20] sm:$0xff]
    %v259 = vld [vmem:[#allocation8 + $0x28] sm:$0xff]
    %v260 = vld [vmem:[#allocation8 + $0x30] sm:$0xff]
    %v261 = vld [vmem:[#allocation8 + $0x38] sm:$0xff]
    %v262 = vld [vmem:[#allocation8 + $0x40] sm:$0xff]
    %v263 = vld [vmem:[#allocation8 + $0x48] sm:$0xff]
    %v264 = vld [vmem:[#allocation8 + $0x50] sm:$0xff]
    %v265 = vld [vmem:[#allocation8 + $0x58] sm:$0xff]
    %v266 = vld [vmem:[#allocation8 + $0x60] sm:$0xff]
    %v267 = vld [vmem:[#allocation8 + $0x68] sm:$0xff]
    %v268 = vld [vmem:[#allocation8 + $0x70] sm:$0xff]
    %v269 = vld [vmem:[#allocation8 + $0x78] sm:$0xff]
    %v270 = vld [vmem:[%s6] sm:$0x1]
    %v272 = vperm.slane %v270, 0
    %274 = vmatpush.msra.mxu0 %v269
    %275 = vmatpush.msra.mxu0 %v268
    %276 = vmatpush.msra.mxu0 %v267
    %277 = vmatpush.msra.mxu0 %v266
    %278 = vmatpush.msra.mxu0 %v265
    %279 = vmatpush.msra.mxu0 %v264
    %280 = vmatpush.msra.mxu0 %v263
    %281 = vmatpush.msra.mxu0 %v262
    %282 = vmatpush.msra.mxu0 %v261
    %283 = vmatpush.msra.mxu0 %v260
    %284 = vmatpush.msra.mxu0 %v259
    %285 = vmatpush.msra.mxu0 %v258
    %286 = vmatpush.msra.mxu0 %v257
    %287 = vmatpush.msra.mxu0 %v256
    %288 = vmatpush.msra.mxu0 %v255
    %289 = vmatpush.msra.mxu0 %v254
    %290 = vmatmul.f32.gmra.mxu0 %v238
    %v291 = vpop.f32.mrf.mxu0
    %v292 = vadd.f32 %v272, %v291
    %293 = vmatmul.f32.gmra.mxu0 %v253
    %v294 = vpop.f32.mrf.mxu0
    %v295 = vadd.f32 %v272, %v294
    %296 = vdwg.mxu0
    %297 = vst [vmem:[#allocation10] sm:$0xff] %v292
    %298 = vst [vmem:[#allocation10 + $0x8] sm:$0xff] %v295
    // Predicated region
    $region46: #{tpu_custom_call.1} parent=1 // pred_check
      _
    $region47: #{tpu_custom_call.1} parent=1 // pred_check_branch
      %300 = sbr.rel (0) target = $region49
    $region48: #{tpu_custom_call.1} parent=1 // pred_region
      %302 = vsyncadd [#allocation4], 0
      %s303 = sshll.u32 [#allocation10], 4
      %s304 = int_to_ptr.vmem [resolvable:$true] %s303
      %s305 = sshll.u32 %s7, 4
      %s306 = int_to_ptr.hbm [resolvable:$true] %s305
      %311 = dma.vmem_to_hbm [thread:$0]  %s304, 256, %s306, [#allocation4], 128, 128, 8
    $region49: #{tpu_custom_call.1} parent=1 // pred_fallthru
      _
    // Predicated region
    $region50: #{tpu_custom_call.1} parent=1 // pred_check
      _
    $region51: #{tpu_custom_call.1} parent=1 // pred_check_branch
      %313 = sbr.rel (0) target = $region53
    $region52: #{tpu_custom_call.1} parent=1 // pred_region
      %315 = dma.done [#allocation4], 256
    $region53: #{tpu_custom_call.1} parent=1 // pred_fallthru
      _
    %316 = vsyncpa [#allocation3], 1
    %317 = vsyncpa [#allocation6], 1
    %318 = vsyncpa [#allocation9], 1
    %319 = vsyncpa [#allocation4], 1

</llo_original>
